<compile_context>
chip_gen: v5e
topology: v5e:2x2
jax: 0.10.0
libtpu: 0.0.40
codegen_flags: <defaults>
</compile_context>

<pallas_src>
import jax
import jax.numpy as jnp
from jax.experimental import pallas as pl
from jax.experimental.pallas import tpu as pltpu

EPS = 1e-5
PF = 128  # padded (lane-dense) hidden width


# --------------------------------------------------------------------------
# Kernel
# --------------------------------------------------------------------------
def _mlp_kernel(x_ref,
                w1_ref, b1_ref, g1_ref, be1_ref,
                w2_ref, b2_ref, g2_ref, be2_ref,
                w3f_ref, b3f_ref,
                o_ref):
    x = x_ref[...]  # (N, F0) bf16

    def bn_relu(h, g_ref, be_ref):
        # BatchNorm1d (training mode) folded to per-feature scale/shift, f32.
        mean = jnp.mean(h, axis=0, keepdims=True)
        d = h - mean
        var = jnp.mean(d * d, axis=0, keepdims=True)        # biased variance
        scale = g_ref[...] * jax.lax.rsqrt(var + EPS)        # rsqrt -> EUP slot
        shift = be_ref[...] - mean * scale
        return jnp.maximum(h * scale + shift, 0.0)           # BN + ReLU

    # Layer 1: bf16 x bf16 -> f32 accumulate on the MXU.
    h1 = jnp.dot(x, w1_ref[...], preferred_element_type=jnp.float32) + b1_ref[...]
    h1 = bn_relu(h1, g1_ref, be1_ref)                        # (N, PF) f32

    # Layer 2.
    h2 = jnp.dot(h1.astype(jnp.bfloat16), w2_ref[...],
                 preferred_element_type=jnp.float32) + b2_ref[...]
    h2 = bn_relu(h2, g2_ref, be2_ref)                        # (N, PF) f32

    # Output layer + residual fused into a single MXU push:
    #   [h2 | x] @ [[W3], [Wres]] + (b3 + br)
    h2x = jnp.concatenate([h2.astype(jnp.bfloat16), x], axis=-1)   # (N, PF+F0)
    y = jnp.dot(h2x, w3f_ref[...], preferred_element_type=jnp.float32) + b3f_ref[...]
    o_ref[...] = y.astype(o_ref.dtype)


# --------------------------------------------------------------------------
# One-time parameter preparation (init-time; NOT on the per-call path)
# --------------------------------------------------------------------------
def prepare_params(params):
    """Pad / cast / fuse parameters once. Per-forward work touches only x."""
    f0 = params["w1"].shape[0]
    f2 = params["w2"].shape[1]
    f3 = params["w3"].shape[1]

    def pad2(a, rows, cols, dtype):
        out = jnp.zeros((rows, cols), dtype)
        return out.at[:a.shape[0], :a.shape[1]].set(a.astype(dtype))

    # Weights in bf16 (MXU-native on v6e/v7x), biases / BN params in f32.
    w1p = pad2(params["w1"], f0, PF, jnp.bfloat16)            # (F0, PF)
    w2p = pad2(params["w2"], PF, PF, jnp.bfloat16)            # (PF, PF)

    # Residual fused into the output matmul:
    #   rows [0:f2)       <- W3   (consumes the h2 block)
    #   rows [PF:PF+f0)   <- Wres (consumes the x block)
    w3f = jnp.zeros((PF + f0, f3), jnp.bfloat16)
    w3f = w3f.at[:f2, :].set(params["w3"].astype(jnp.bfloat16))
    w3f = w3f.at[PF:PF + f0, :].set(params["wr"].astype(jnp.bfloat16))

    b1p = pad2(params["b1"], 1, PF, jnp.float32)
    g1p = pad2(params["g1"], 1, PF, jnp.float32)    # zero gamma in padded cols
    be1p = pad2(params["be1"], 1, PF, jnp.float32)
    b2p = pad2(params["b2"], 1, PF, jnp.float32)
    g2p = pad2(params["g2"], 1, PF, jnp.float32)
    be2p = pad2(params["be2"], 1, PF, jnp.float32)
    b3f = (params["b3"] + params["br"]).astype(jnp.float32)   # (1, F3)

    return {"w1": w1p, "b1": b1p, "g1": g1p, "be1": be1p,
            "w2": w2p, "b2": b2p, "g2": g2p, "be2": be2p,
            "w3f": w3f, "b3f": b3f}


# --------------------------------------------------------------------------
# Per-call forward
# --------------------------------------------------------------------------
def mlp_forward(x, prep):
    """x: (N, F0) float32. prep: output of prepare_params (already padded/bf16)."""
    N = x.shape[0]
    f0 = prep["w1"].shape[0]
    f3 = prep["w3f"].shape[1]

    # Only per-call op on the host side: stream x as bf16 (halves DMA bytes;
    # BN renormalizes so the precision impact is negligible).
    xb = x.astype(jnp.bfloat16)

    inputs = (xb,
              prep["w1"], prep["b1"], prep["g1"], prep["be1"],
              prep["w2"], prep["b2"], prep["g2"], prep["be2"],
              prep["w3f"], prep["b3f"])

    flops = 2 * N * (f0 * PF + PF * PF + (PF + f0) * f3)
    bytes_accessed = sum(int(a.size) * a.dtype.itemsize for a in inputs) + N * f3 * 4
    cost = pl.CostEstimate(flops=flops, transcendentals=2 * PF,
                           bytes_accessed=bytes_accessed)

    # Single VMEM-resident block (whole batch must share BN statistics).
    # TODO(synk): batch-tiled "parallel" grid + two-pass BN for large N (see header).
    out = pl.pallas_call(
        _mlp_kernel,
        out_shape=jax.ShapeDtypeStruct((N, f3), jnp.float32),
        in_specs=[pl.BlockSpec(memory_space=pltpu.MemorySpace.VMEM)] * len(inputs),
        out_specs=pl.BlockSpec(memory_space=pltpu.MemorySpace.VMEM),
        cost_estimate=cost,
    )(*inputs)
    return out


# --------------------------------------------------------------------------
# Synthetic init + pure-JAX reference
# --------------------------------------------------------------------------
def init_params(key, features):
    """Deterministic synthetic init. Weights stored as (F_in, F_out)."""
    f0, f1, f2, f3 = features
    keys = jax.random.split(key, 8)

    def w(k, fin, fout):
        return jax.random.normal(k, (fin, fout), jnp.float32) / jnp.sqrt(fin)

    def row(k, f):
        return jax.random.normal(k, (1, f), jnp.float32) * 0.1

    return {
        "w1": w(keys[0], f0, f1), "b1": row(keys[1], f1),
        "g1": jnp.ones((1, f1), jnp.float32), "be1": jnp.zeros((1, f1), jnp.float32),
        "w2": w(keys[2], f1, f2), "b2": row(keys[3], f2),
        "g2": jnp.ones((1, f2), jnp.float32), "be2": jnp.zeros((1, f2), jnp.float32),
        "w3": w(keys[4], f2, f3), "b3": row(keys[5], f3),
        "wr": w(keys[6], f0, f3), "br": row(keys[7], f3),
    }


def mlp_ref(x, p):
    """Pure-JAX f32 reference for the same forward pass (unpadded)."""
    def bn(h, g, be):
        m = h.mean(0, keepdims=True)
        v = ((h - m) ** 2).mean(0, keepdims=True)
        return (h - m) / jnp.sqrt(v + EPS) * g + be

    h1 = jax.nn.relu(bn(x @ p["w1"] + p["b1"], p["g1"], p["be1"]))
    h2 = jax.nn.relu(bn(h1 @ p["w2"] + p["b2"], p["g2"], p["be2"]))
    return (h2 @ p["w3"] + p["b3"]) + (x @ p["wr"] + p["br"])


if __name__ == "__main__":
    features = [32, 64, 64, 16]
    batch = 8

    key = jax.random.PRNGKey(0)
    kx, kp = jax.random.split(key)
    x = jax.random.normal(kx, (batch, features[0]), jnp.float32)
    params = init_params(kp, features)

    # One-time prepare (padding / bf16 cast / residual fusion) -- off the hot path.
    prep = prepare_params(params)

    fwd = jax.jit(mlp_forward)
    out = jax.block_until_ready(fwd(x, prep))

    ref = mlp_ref(x, params)
    assert out.shape == (batch, features[-1])
    # bf16 matmul operands (f32 accumulation) -> loosened tolerance vs f32 ref.
    err = float(jnp.max(jnp.abs(out - ref)))
    assert jnp.allclose(out, ref, atol=1e-1, rtol=1e-1), (
        f"mismatch vs JAX reference, max_abs_err={err}")

    print("KERNEL_OK")
</pallas_src>

<mosaic_0001>
module attributes {stable_mosaic.version = 11 : i64} {
  func.func @_mlp_kernel(%arg0: memref<8x32xbf16, #tpu.memory_space<vmem>>, %arg1: memref<32x128xbf16, #tpu.memory_space<vmem>>, %arg2: memref<1x128xf32, #tpu.memory_space<vmem>>, %arg3: memref<1x128xf32, #tpu.memory_space<vmem>>, %arg4: memref<1x128xf32, #tpu.memory_space<vmem>>, %arg5: memref<128x128xbf16, #tpu.memory_space<vmem>>, %arg6: memref<1x128xf32, #tpu.memory_space<vmem>>, %arg7: memref<1x128xf32, #tpu.memory_space<vmem>>, %arg8: memref<1x128xf32, #tpu.memory_space<vmem>>, %arg9: memref<160x16xbf16, #tpu.memory_space<vmem>>, %arg10: memref<1x16xf32, #tpu.memory_space<vmem>>, %arg11: memref<8x16xf32, #tpu.memory_space<vmem>>) attributes {dimension_semantics = [], scalar_prefetch = 0 : i64, scratch_operands = 0 : i64, tpu.core_type = #tpu.core_type<tc>} {
    %c0 = arith.constant 0 : index
    %c0_0 = arith.constant 0 : index
    %0 = vector.load %arg0[%c0, %c0_0] : memref<8x32xbf16, #tpu.memory_space<vmem>>, vector<8x32xbf16>
    %c0_1 = arith.constant 0 : index
    %c0_2 = arith.constant 0 : index
    %1 = vector.load %arg1[%c0_1, %c0_2] : memref<32x128xbf16, #tpu.memory_space<vmem>>, vector<32x128xbf16>
    %cst = arith.constant dense<0.000000e+00> : vector<8x128xf32>
    %2 = tpu.matmul %0, %1, %cst {dimension_numbers = #tpu.dot_dimension_numbers<[1], [0], [0], [1], [0, 0, 1, 1], [], []>} : vector<8x32xbf16>, vector<32x128xbf16>, vector<8x128xf32> -> vector<8x128xf32>
    %c0_3 = arith.constant 0 : index
    %c0_4 = arith.constant 0 : index
    %3 = vector.load %arg2[%c0_3, %c0_4] : memref<1x128xf32, #tpu.memory_space<vmem>>, vector<1x128xf32>
    %4 = vector.broadcast %3 : vector<1x128xf32> to vector<8x128xf32>
    %5 = arith.addf %2, %4 : vector<8x128xf32>
    %cst_5 = arith.constant dense<0.000000e+00> : vector<128xf32>
    %6 = vector.multi_reduction <add>, %5, %cst_5 [0] : vector<8x128xf32> to vector<128xf32>
    %7 = vector.shape_cast %6 : vector<128xf32> to vector<1x128xf32>
    %cst_6 = arith.constant 8.000000e+00 : f32
    %8 = vector.broadcast %cst_6 : f32 to vector<1x128xf32>
    %9 = arith.divf %7, %8 : vector<1x128xf32>
    %10 = vector.broadcast %9 : vector<1x128xf32> to vector<8x128xf32>
    %11 = arith.subf %5, %10 : vector<8x128xf32>
    %12 = arith.mulf %11, %11 : vector<8x128xf32>
    %cst_7 = arith.constant dense<0.000000e+00> : vector<128xf32>
    %13 = vector.multi_reduction <add>, %12, %cst_7 [0] : vector<8x128xf32> to vector<128xf32>
    %14 = vector.shape_cast %13 : vector<128xf32> to vector<1x128xf32>
    %cst_8 = arith.constant 8.000000e+00 : f32
    %15 = vector.broadcast %cst_8 : f32 to vector<1x128xf32>
    %16 = arith.divf %14, %15 : vector<1x128xf32>
    %c0_9 = arith.constant 0 : index
    %c0_10 = arith.constant 0 : index
    %17 = vector.load %arg3[%c0_9, %c0_10] : memref<1x128xf32, #tpu.memory_space<vmem>>, vector<1x128xf32>
    %cst_11 = arith.constant 9.99999974E-6 : f32
    %18 = vector.broadcast %cst_11 : f32 to vector<1x128xf32>
    %19 = arith.addf %16, %18 : vector<1x128xf32>
    %20 = math.rsqrt %19 : vector<1x128xf32>
    %21 = arith.mulf %17, %20 : vector<1x128xf32>
    %c0_12 = arith.constant 0 : index
    %c0_13 = arith.constant 0 : index
    %22 = vector.load %arg4[%c0_12, %c0_13] : memref<1x128xf32, #tpu.memory_space<vmem>>, vector<1x128xf32>
    %23 = arith.mulf %9, %21 : vector<1x128xf32>
    %24 = arith.subf %22, %23 : vector<1x128xf32>
    %25 = vector.broadcast %21 : vector<1x128xf32> to vector<8x128xf32>
    %26 = arith.mulf %5, %25 : vector<8x128xf32>
    %27 = vector.broadcast %24 : vector<1x128xf32> to vector<8x128xf32>
    %28 = arith.addf %26, %27 : vector<8x128xf32>
    %cst_14 = arith.constant 0.000000e+00 : f32
    %29 = vector.broadcast %cst_14 : f32 to vector<8x128xf32>
    %30 = arith.maximumf %28, %29 : vector<8x128xf32>
    %31 = arith.truncf %30 : vector<8x128xf32> to vector<8x128xbf16>
    %c0_15 = arith.constant 0 : index
    %c0_16 = arith.constant 0 : index
    %32 = vector.load %arg5[%c0_15, %c0_16] : memref<128x128xbf16, #tpu.memory_space<vmem>>, vector<128x128xbf16>
    %cst_17 = arith.constant dense<0.000000e+00> : vector<8x128xf32>
    %33 = tpu.matmul %31, %32, %cst_17 {dimension_numbers = #tpu.dot_dimension_numbers<[1], [0], [0], [1], [0, 0, 1, 1], [], []>} : vector<8x128xbf16>, vector<128x128xbf16>, vector<8x128xf32> -> vector<8x128xf32>
    %c0_18 = arith.constant 0 : index
    %c0_19 = arith.constant 0 : index
    %34 = vector.load %arg6[%c0_18, %c0_19] : memref<1x128xf32, #tpu.memory_space<vmem>>, vector<1x128xf32>
    %35 = vector.broadcast %34 : vector<1x128xf32> to vector<8x128xf32>
    %36 = arith.addf %33, %35 : vector<8x128xf32>
    %cst_20 = arith.constant dense<0.000000e+00> : vector<128xf32>
    %37 = vector.multi_reduction <add>, %36, %cst_20 [0] : vector<8x128xf32> to vector<128xf32>
    %38 = vector.shape_cast %37 : vector<128xf32> to vector<1x128xf32>
    %cst_21 = arith.constant 8.000000e+00 : f32
    %39 = vector.broadcast %cst_21 : f32 to vector<1x128xf32>
    %40 = arith.divf %38, %39 : vector<1x128xf32>
    %41 = vector.broadcast %40 : vector<1x128xf32> to vector<8x128xf32>
    %42 = arith.subf %36, %41 : vector<8x128xf32>
    %43 = arith.mulf %42, %42 : vector<8x128xf32>
    %cst_22 = arith.constant dense<0.000000e+00> : vector<128xf32>
    %44 = vector.multi_reduction <add>, %43, %cst_22 [0] : vector<8x128xf32> to vector<128xf32>
    %45 = vector.shape_cast %44 : vector<128xf32> to vector<1x128xf32>
    %cst_23 = arith.constant 8.000000e+00 : f32
    %46 = vector.broadcast %cst_23 : f32 to vector<1x128xf32>
    %47 = arith.divf %45, %46 : vector<1x128xf32>
    %c0_24 = arith.constant 0 : index
    %c0_25 = arith.constant 0 : index
    %48 = vector.load %arg7[%c0_24, %c0_25] : memref<1x128xf32, #tpu.memory_space<vmem>>, vector<1x128xf32>
    %cst_26 = arith.constant 9.99999974E-6 : f32
    %49 = vector.broadcast %cst_26 : f32 to vector<1x128xf32>
    %50 = arith.addf %47, %49 : vector<1x128xf32>
    %51 = math.rsqrt %50 : vector<1x128xf32>
    %52 = arith.mulf %48, %51 : vector<1x128xf32>
    %c0_27 = arith.constant 0 : index
    %c0_28 = arith.constant 0 : index
    %53 = vector.load %arg8[%c0_27, %c0_28] : memref<1x128xf32, #tpu.memory_space<vmem>>, vector<1x128xf32>
    %54 = arith.mulf %40, %52 : vector<1x128xf32>
    %55 = arith.subf %53, %54 : vector<1x128xf32>
    %56 = vector.broadcast %52 : vector<1x128xf32> to vector<8x128xf32>
    %57 = arith.mulf %36, %56 : vector<8x128xf32>
    %58 = vector.broadcast %55 : vector<1x128xf32> to vector<8x128xf32>
    %59 = arith.addf %57, %58 : vector<8x128xf32>
    %cst_29 = arith.constant 0.000000e+00 : f32
    %60 = vector.broadcast %cst_29 : f32 to vector<8x128xf32>
    %61 = arith.maximumf %59, %60 : vector<8x128xf32>
    %62 = arith.truncf %61 : vector<8x128xf32> to vector<8x128xbf16>
    %63 = tpu.concatenate %62, %0 in 1 : vector<8x128xbf16>, vector<8x32xbf16> -> vector<8x160xbf16>
    %c0_30 = arith.constant 0 : index
    %c0_31 = arith.constant 0 : index
    %64 = vector.load %arg9[%c0_30, %c0_31] : memref<160x16xbf16, #tpu.memory_space<vmem>>, vector<160x16xbf16>
    %cst_32 = arith.constant dense<0.000000e+00> : vector<8x16xf32>
    %65 = tpu.matmul %63, %64, %cst_32 {dimension_numbers = #tpu.dot_dimension_numbers<[1], [0], [0], [1], [0, 0, 1, 1], [], []>} : vector<8x160xbf16>, vector<160x16xbf16>, vector<8x16xf32> -> vector<8x16xf32>
    %c0_33 = arith.constant 0 : index
    %c0_34 = arith.constant 0 : index
    %66 = vector.load %arg10[%c0_33, %c0_34] : memref<1x16xf32, #tpu.memory_space<vmem>>, vector<1x16xf32>
    %67 = vector.broadcast %66 : vector<1x16xf32> to vector<8x16xf32>
    %68 = arith.addf %65, %67 : vector<8x16xf32>
    %c0_35 = arith.constant 0 : index
    %c0_36 = arith.constant 0 : index
    %69 = vector.load %arg11[%c0_35, %c0_36] : memref<8x16xf32, #tpu.memory_space<vmem>>, vector<8x16xf32>
    tpu.vector_store %arg11[%c0_35, %c0_36], %68 {strides = array<i32>} : memref<8x16xf32, #tpu.memory_space<vmem>>, vector<8x16xf32>,
    return
  }
}

</mosaic_0001>

<llo_original>
// kernel: mlp_forward.1
$region0: #{mlp_forward.1}
  #allocation0 [shape = 'u32[]', space=smem, size = 0x4, offset = 0x4, fixed_abs, tag = 'smem constant byte address 0x4 - core index']
  #allocation1 [shape = 'u32[72,128]{1,0:T(1,128)}', space=vmem, size = 0x9000, scoped, tag = 'internal scratch']
  %s0 = inlined_call_operand.vmem [shape: bf16[8,32], index: 0, kind: input, shape index: {}]
  %s1 = inlined_call_operand.vmem [shape: bf16[32,128], index: 1, kind: input, shape index: {}]
  %s2 = inlined_call_operand.vmem [shape: f32[1,128], index: 2, kind: input, shape index: {}]
  %s3 = inlined_call_operand.vmem [shape: f32[1,128], index: 3, kind: input, shape index: {}]
  %s4 = inlined_call_operand.vmem [shape: f32[1,128], index: 4, kind: input, shape index: {}]
  %s5 = inlined_call_operand.vmem [shape: bf16[128,128], index: 5, kind: input, shape index: {}]
  %s6 = inlined_call_operand.vmem [shape: f32[1,128], index: 6, kind: input, shape index: {}]
  %s7 = inlined_call_operand.vmem [shape: f32[1,128], index: 7, kind: input, shape index: {}]
  %s8 = inlined_call_operand.vmem [shape: f32[1,128], index: 8, kind: input, shape index: {}]
  %s9 = inlined_call_operand.vmem [shape: bf16[160,16], index: 9, kind: input, shape index: {}]
  %s10 = inlined_call_operand.vmem [shape: f32[1,16], index: 10, kind: input, shape index: {}]
  %s11 = inlined_call_operand.hbm [shape: f32[8,16], index: 11, kind: output, shape index: {}]
  %s12 = sld [smem:[#allocation0]]
  $region54: #{mlp_forward.1} parent=0
    _
  %s14 = ssub.s32 1, %s12
  %s15 = scalar_select 0, %s14, %s12
  $region1: #{mlp_forward.1} parent=0
    #allocation2 [shape = 'u8[4096]{0}', space=vmem, size = 0x1000, scoped, tag = 'output window, operand 0, single buffered']
    #allocation3 [shape = 's32[1]{0}', space=sflag, size = 0x4, scoped, tag = 'scoped memory for mlp_forward.1']
    %16 = vsyncpa [#allocation3], 0
    // Predicated region
    $region2: #{mlp_forward.1} parent=1 // pred_check
      _
    $region3: #{mlp_forward.1} parent=1 // pred_check_branch
      %18 = sbr.rel (0) target = $region5
    $region4: #{mlp_forward.1} parent=1 // pred_region
      _
    $region5: #{mlp_forward.1} parent=1 // pred_fallthru
      _
    // Predicated region
    $region6: #{mlp_forward.1} parent=1 // pred_check
      _
    $region7: #{mlp_forward.1} parent=1 // pred_check_branch
      %20 = sbr.rel (0) target = $region9
    $region8: #{mlp_forward.1} parent=1 // pred_region
      _
    $region9: #{mlp_forward.1} parent=1 // pred_fallthru
      _
    // Predicated region
    $region10: #{mlp_forward.1} parent=1 // pred_check
      _
    $region11: #{mlp_forward.1} parent=1 // pred_check_branch
      %22 = sbr.rel (0) target = $region13
    $region12: #{mlp_forward.1} parent=1 // pred_region
      _
    $region13: #{mlp_forward.1} parent=1 // pred_fallthru
      _
    // Predicated region
    $region14: #{mlp_forward.1} parent=1 // pred_check
      _
    $region15: #{mlp_forward.1} parent=1 // pred_check_branch
      %24 = sbr.rel (0) target = $region17
    $region16: #{mlp_forward.1} parent=1 // pred_region
      _
    $region17: #{mlp_forward.1} parent=1 // pred_fallthru
      _
    // Predicated region
    $region18: #{mlp_forward.1} parent=1 // pred_check
      _
    $region19: #{mlp_forward.1} parent=1 // pred_check_branch
      %26 = sbr.rel (0) target = $region21
    $region20: #{mlp_forward.1} parent=1 // pred_region
      _
    $region21: #{mlp_forward.1} parent=1 // pred_fallthru
      _
    // Predicated region
    $region22: #{mlp_forward.1} parent=1 // pred_check
      _
    $region23: #{mlp_forward.1} parent=1 // pred_check_branch
      %28 = sbr.rel (0) target = $region25
    $region24: #{mlp_forward.1} parent=1 // pred_region
      _
    $region25: #{mlp_forward.1} parent=1 // pred_fallthru
      _
    // Predicated region
    $region26: #{mlp_forward.1} parent=1 // pred_check
      _
    $region27: #{mlp_forward.1} parent=1 // pred_check_branch
      %30 = sbr.rel (0) target = $region29
    $region28: #{mlp_forward.1} parent=1 // pred_region
      _
    $region29: #{mlp_forward.1} parent=1 // pred_fallthru
      _
    // Predicated region
    $region30: #{mlp_forward.1} parent=1 // pred_check
      _
    $region31: #{mlp_forward.1} parent=1 // pred_check_branch
      %32 = sbr.rel (0) target = $region33
    $region32: #{mlp_forward.1} parent=1 // pred_region
      _
    $region33: #{mlp_forward.1} parent=1 // pred_fallthru
      _
    // Predicated region
    $region34: #{mlp_forward.1} parent=1 // pred_check
      _
    $region35: #{mlp_forward.1} parent=1 // pred_check_branch
      %34 = sbr.rel (0) target = $region37
    $region36: #{mlp_forward.1} parent=1 // pred_region
      _
    $region37: #{mlp_forward.1} parent=1 // pred_fallthru
      _
    // Predicated region
    $region38: #{mlp_forward.1} parent=1 // pred_check
      _
    $region39: #{mlp_forward.1} parent=1 // pred_check_branch
      %36 = sbr.rel (0) target = $region41
    $region40: #{mlp_forward.1} parent=1 // pred_region
      _
    $region41: #{mlp_forward.1} parent=1 // pred_fallthru
      _
    // Predicated region
    $region42: #{mlp_forward.1} parent=1 // pred_check
      _
    $region43: #{mlp_forward.1} parent=1 // pred_check_branch
      %38 = sbr.rel (0) target = $region45
    $region44: #{mlp_forward.1} parent=1 // pred_region
      _
    $region45: #{mlp_forward.1} parent=1 // pred_fallthru
      _
    %v40 = vld [vmem:[%s0] sm:$0xf]
    %v41 = vld [vmem:[%s1] sm:$0xf]
    %v42 = vld [vmem:[%s1 + $0x4] sm:$0xf]
    %v43 = vld [vmem:[%s1 + $0x8] sm:$0xf]
    %v44 = vld [vmem:[%s1 + $0xc] sm:$0xf]
    %v45 = vld [vmem:[%s2] sm:$0x1]
    %v47 = vperm.slane %v45, 0
    %v53 = vunpack.c.l.b16 %v41
    %v54 = vunpack.c.l.b16 %v42
    %v55 = vunpack.c.l.b16 %v43
    %v56 = vunpack.c.l.b16 %v44
    %v57 = vpack.c.b16 %v54, %v53
    %v58 = vpack.c.b16 %v56, %v55
    %vm61 = vcmask 261120
    %v63 = vsel %vm61, %v40, 0
    %65 = vmatpush.bf16.msra.mxu0 0
    %66 = vmatpush.bf16.msra.mxu0 0
    %67 = vmatpush.bf16.msra.mxu0 0
    %68 = vmatpush.bf16.msra.mxu0 0
    %69 = vmatpush.bf16.msra.mxu0 0
    %70 = vmatpush.bf16.msra.mxu0 0
    %71 = vmatpush.bf16.msra.mxu0 %v58
    %72 = vmatpush.bf16.msra.mxu0 %v57
    %73 = vmatmul.bf16.gmra.mxu0 %v63
    %v74 = vpop.f32.mrf.mxu0
    %v75 = vadd.f32 %v47, %v74
    %v76 = vpop.f32.mrf.mxu0
    %77 = vdwg.mxu0
    %v78 = vrot.slane %v75, 4
    %v79 = vadd.f32 %v75, %v78
    %v80 = vrot.slane %v79, 2
    %v81 = vadd.f32 %v79, %v80
    %v82 = vrot.slane %v81, 1
    %v83 = vadd.f32 %v81, %v82
    %v84 = vrcp.pop 8.0
    %v85 = vmul.f32 8.0, %v84
    %v86 = vsub.f32 1.0, %v85
    %v87 = vmul.f32 %v84, %v86
    %v88 = vadd.f32 %v84, %v87
    %vm89 = vweird.f32 %v84
    %v90 = vsel %vm89, %v84, %v88
    %v91 = vmul.f32 %v83, %v90
    %v92 = vsub.f32 %v75, %v91
    %v93 = vmul.f32 %v92, %v92
    %v94 = vrot.slane %v93, 4
    %v95 = vadd.f32 %v93, %v94
    %v96 = vrot.slane %v95, 2
    %v97 = vadd.f32 %v95, %v96
    %v98 = vrot.slane %v97, 1
    %v99 = vadd.f32 %v97, %v98
    %v100 = vmul.f32 %v99, %v90
    %v101 = vld [vmem:[%s3] sm:$0x1]
    %v102 = vadd.f32 %v100, 1e-05
    %v103 = vrsqrt.pop %v102
    %v104 = vmul.f32 %v103, %v102
    %v105 = vmul.f32 %v104, %v103
    %v106 = vmul.f32 0.5, %v105
    %v107 = vsub.f32 1.5, %v106
    %v108 = vmul.f32 %v103, %v107
    %vm109 = vweird.f32 %v102
    %vm110 = vweird.f32 %v103
    %vm111 = vmor %vm109, %vm110
    %v112 = vsel %vm111, %v103, %v108
    %v113 = vmul.f32 %v101, %v112
    %v114 = vld [vmem:[%s4] sm:$0x1]
    %v115 = vmul.f32 %v91, %v113
    %v116 = vsub.f32 %v114, %v115
    %v118 = vperm.slane %v113, 0
    %v120 = vmul.f32 %v75, %v118
    %v122 = vperm.slane %v116, 0
    %v124 = vadd.f32 %v120, %v122
    %v125 = vmax.f32 %v124, 0.0
    %v126 = vpack.c.bf16 %v125, %v125
    %v127 = vld [vmem:[%s5] sm:$0xf]
    %v128 = vld [vmem:[%s5 + $0x4] sm:$0xf]
    %v129 = vld [vmem:[%s5 + $0x8] sm:$0xf]
    %v130 = vld [vmem:[%s5 + $0xc] sm:$0xf]
    %v131 = vld [vmem:[%s5 + $0x10] sm:$0xf]
    %v132 = vld [vmem:[%s5 + $0x14] sm:$0xf]
    %v133 = vld [vmem:[%s5 + $0x18] sm:$0xf]
    %v134 = vld [vmem:[%s5 + $0x1c] sm:$0xf]
    %v135 = vld [vmem:[%s5 + $0x20] sm:$0xf]
    %v136 = vld [vmem:[%s5 + $0x24] sm:$0xf]
    %v137 = vld [vmem:[%s5 + $0x28] sm:$0xf]
    %v138 = vld [vmem:[%s5 + $0x2c] sm:$0xf]
    %v139 = vld [vmem:[%s5 + $0x30] sm:$0xf]
    %v140 = vld [vmem:[%s5 + $0x34] sm:$0xf]
    %v141 = vld [vmem:[%s5 + $0x38] sm:$0xf]
    %v142 = vld [vmem:[%s5 + $0x3c] sm:$0xf]
    %v143 = vld [vmem:[%s6] sm:$0x1]
    %v145 = vperm.slane %v143, 0
    %v163 = vunpack.c.l.b16 %v127
    %v164 = vunpack.c.l.b16 %v128
    %v165 = vunpack.c.l.b16 %v129
    %v166 = vunpack.c.l.b16 %v130
    %v167 = vunpack.c.l.b16 %v131
    %v168 = vunpack.c.l.b16 %v132
    %v169 = vunpack.c.l.b16 %v133
    %v170 = vunpack.c.l.b16 %v134
    %v171 = vunpack.c.l.b16 %v135
    %v172 = vunpack.c.l.b16 %v136
    %v173 = vunpack.c.l.b16 %v137
    %v174 = vunpack.c.l.b16 %v138
    %v175 = vunpack.c.l.b16 %v139
    %v176 = vunpack.c.l.b16 %v140
    %v177 = vunpack.c.l.b16 %v141
    %v178 = vunpack.c.l.b16 %v142
    %v179 = vpack.c.b16 %v164, %v163
    %v180 = vpack.c.b16 %v166, %v165
    %v181 = vpack.c.b16 %v168, %v167
    %v182 = vpack.c.b16 %v170, %v169
    %v183 = vpack.c.b16 %v172, %v171
    %v184 = vpack.c.b16 %v174, %v173
    %v185 = vpack.c.b16 %v176, %v175
    %v186 = vpack.c.b16 %v178, %v177
    %195 = vmatpush.bf16.msra.mxu0 %v186
    %196 = vmatpush.bf16.msra.mxu0 %v185
    %197 = vmatpush.bf16.msra.mxu0 %v184
    %198 = vmatpush.bf16.msra.mxu0 %v183
    %199 = vmatpush.bf16.msra.mxu0 %v182
    %200 = vmatpush.bf16.msra.mxu0 %v181
    %201 = vmatpush.bf16.msra.mxu0 %v180
    %202 = vmatpush.bf16.msra.mxu0 %v179
    %203 = vmatmul.bf16.gmra.mxu0 %v126
    %v204 = vpop.f32.mrf.mxu0
    %v205 = vadd.f32 %v145, %v204
    %v206 = vpop.f32.mrf.mxu0
    %207 = vdwg.mxu0
    %v208 = vrot.slane %v205, 4
    %v209 = vadd.f32 %v205, %v208
    %v210 = vrot.slane %v209, 2
    %v211 = vadd.f32 %v209, %v210
    %v212 = vrot.slane %v211, 1
    %v213 = vadd.f32 %v211, %v212
    %v214 = vmul.f32 %v213, %v90
    %v215 = vsub.f32 %v205, %v214
    %v216 = vmul.f32 %v215, %v215
    %v217 = vrot.slane %v216, 4
    %v218 = vadd.f32 %v216, %v217
    %v219 = vrot.slane %v218, 2
    %v220 = vadd.f32 %v218, %v219
    %v221 = vrot.slane %v220, 1
    %v222 = vadd.f32 %v220, %v221
    %v223 = vmul.f32 %v222, %v90
    %v224 = vld [vmem:[%s7] sm:$0x1]
    %v225 = vadd.f32 %v223, 1e-05
    %v226 = vrsqrt.pop %v225
    %v227 = vmul.f32 %v226, %v225
    %v228 = vmul.f32 %v227, %v226
    %v229 = vmul.f32 0.5, %v228
    %v230 = vsub.f32 1.5, %v229
    %v231 = vmul.f32 %v226, %v230
    %vm232 = vweird.f32 %v225
    %vm233 = vweird.f32 %v226
    %vm234 = vmor %vm232, %vm233
    %v235 = vsel %vm234, %v226, %v231
    %v236 = vmul.f32 %v224, %v235
    %v237 = vld [vmem:[%s8] sm:$0x1]
    %v238 = vmul.f32 %v214, %v236
    %v239 = vsub.f32 %v237, %v238
    %v241 = vperm.slane %v236, 0
    %v243 = vmul.f32 %v205, %v241
    %v245 = vperm.slane %v239, 0
    %v247 = vadd.f32 %v243, %v245
    %v248 = vmax.f32 %v247, 0.0
    %v249 = vpack.c.bf16 %v248, %v248
    %v250 = vld [vmem:[%s9] sm:$0xf]
    %v251 = vld [vmem:[%s9 + $0x4] sm:$0xf]
    %v252 = vld [vmem:[%s9 + $0x8] sm:$0xf]
    %v253 = vld [vmem:[%s9 + $0xc] sm:$0xf]
    %v254 = vld [vmem:[%s9 + $0x10] sm:$0xf]
    %v255 = vld [vmem:[%s9 + $0x14] sm:$0xf]
    %v256 = vld [vmem:[%s9 + $0x18] sm:$0xf]
    %v257 = vld [vmem:[%s9 + $0x1c] sm:$0xf]
    %v258 = vld [vmem:[%s9 + $0x20] sm:$0xf]
    %v259 = vld [vmem:[%s9 + $0x24] sm:$0xf]
    %v260 = vld [vmem:[%s9 + $0x28] sm:$0xf]
    %v261 = vld [vmem:[%s9 + $0x2c] sm:$0xf]
    %v262 = vld [vmem:[%s9 + $0x30] sm:$0xf]
    %v263 = vld [vmem:[%s9 + $0x34] sm:$0xf]
    %v264 = vld [vmem:[%s9 + $0x38] sm:$0xf]
    %v265 = vld [vmem:[%s9 + $0x3c] sm:$0xf]
    %v266 = vld [vmem:[%s9 + $0x40] sm:$0xf]
    %v267 = vld [vmem:[%s9 + $0x44] sm:$0xf]
    %v268 = vld [vmem:[%s9 + $0x48] sm:$0xf]
    %v269 = vld [vmem:[%s9 + $0x4c] sm:$0xf]
    %v270 = vld [vmem:[%s10] sm:$0x1]
    %v272 = vperm.slane %v270, 0
    %v294 = vunpack.c.l.b16 %v250
    %v295 = vunpack.c.l.b16 %v251
    %v296 = vunpack.c.l.b16 %v252
    %v297 = vunpack.c.l.b16 %v253
    %v298 = vunpack.c.l.b16 %v254
    %v299 = vunpack.c.l.b16 %v255
    %v300 = vunpack.c.l.b16 %v256
    %v301 = vunpack.c.l.b16 %v257
    %v302 = vunpack.c.l.b16 %v258
    %v303 = vunpack.c.l.b16 %v259
    %v304 = vunpack.c.l.b16 %v260
    %v305 = vunpack.c.l.b16 %v261
    %v306 = vunpack.c.l.b16 %v262
    %v307 = vunpack.c.l.b16 %v263
    %v308 = vunpack.c.l.b16 %v264
    %v309 = vunpack.c.l.b16 %v265
    %v310 = vunpack.c.l.b16 %v266
    %v311 = vunpack.c.l.b16 %v267
    %v312 = vunpack.c.l.b16 %v268
    %v313 = vunpack.c.l.b16 %v269
    %v314 = vpack.c.b16 %v295, %v294
    %v315 = vpack.c.b16 %v297, %v296
    %v316 = vpack.c.b16 %v299, %v298
    %v317 = vpack.c.b16 %v301, %v300
    %v318 = vpack.c.b16 %v303, %v302
    %v319 = vpack.c.b16 %v305, %v304
    %v320 = vpack.c.b16 %v307, %v306
    %v321 = vpack.c.b16 %v309, %v308
    %v322 = vpack.c.b16 %v311, %v310
    %v323 = vpack.c.b16 %v313, %v312
    %334 = vmatpush.bf16.msra.mxu0 %v321
    %335 = vmatpush.bf16.msra.mxu0 %v320
    %336 = vmatpush.bf16.msra.mxu0 %v319
    %337 = vmatpush.bf16.msra.mxu0 %v318
    %338 = vmatpush.bf16.msra.mxu0 %v317
    %339 = vmatpush.bf16.msra.mxu0 %v316
    %340 = vmatpush.bf16.msra.mxu0 %v315
    %341 = vmatpush.bf16.msra.mxu0 %v314
    %342 = vmatmul.bf16.gmra.mxu0 %v249
    %v343 = vpop.f32.mrf.mxu0
    %v344 = vadd.f32 %v272, %v343
    %v345 = vpop.f32.mrf.mxu0
    %346 = vdwg.mxu0
    %347 = vmatpush.bf16.msra.mxu0 0
    %348 = vmatpush.bf16.msra.mxu0 0
    %349 = vmatpush.bf16.msra.mxu0 0
    %350 = vmatpush.bf16.msra.mxu0 0
    %351 = vmatpush.bf16.msra.mxu0 0
    %352 = vmatpush.bf16.msra.mxu0 0
    %353 = vmatpush.bf16.msra.mxu0 %v323
    %354 = vmatpush.bf16.msra.mxu0 %v322
    %355 = vmatmul.bf16.gmra.mxu0 %v63
    %v356 = vpop.f32.mrf.mxu0
    %v357 = vadd.f32 %v344, %v356
    %v358 = vpop.f32.mrf.mxu0
    %359 = vdwg.mxu0
    %vm360 = vcmask 130048
    %361 = vst.msk [vmem:[#allocation2] sm:$0xff] %vm360, %v357
    // Predicated region
    $region46: #{mlp_forward.1} parent=1 // pred_check
      _
    $region47: #{mlp_forward.1} parent=1 // pred_check_branch
      %363 = sbr.rel (0) target = $region49
    $region48: #{mlp_forward.1} parent=1 // pred_region
      %365 = vsyncadd [#allocation3], 0
      %s367 = sshll.u32 [#allocation2], 4
      %s368 = int_to_ptr.vmem [resolvable:$true] %s367
      %s369 = sshll.u32 %s11, 4
      %s370 = int_to_ptr.hbm [resolvable:$true] %s369
      %372 = dma.vmem_to_hbm [thread:$0]  %s368, 128, %s370, [#allocation3]
    $region49: #{mlp_forward.1} parent=1 // pred_fallthru
      _
    // Predicated region
    $region50: #{mlp_forward.1} parent=1 // pred_check
      _
    $region51: #{mlp_forward.1} parent=1 // pred_check_branch
      %374 = sbr.rel (0) target = $region53
    $region52: #{mlp_forward.1} parent=1 // pred_region
      %376 = dma.done [#allocation3], 128
    $region53: #{mlp_forward.1} parent=1 // pred_fallthru
      _
    %377 = vsyncpa [#allocation3], 1

</llo_original>
